<compile_context>
chip_gen: v7x
topology: tpu7x:2x2x1
jax: 0.10.0
libtpu: 0.0.40
codegen_flags: <defaults>
</compile_context>

<pallas_src>
import functools

import jax
import jax.numpy as jnp
import numpy as np
from jax.experimental import pallas as pl
from jax.experimental.pallas import tpu as pltpu


def _wtd_kernel(p_ref, sat_ref, out_ref, *, elev, thick, nz):
    """Water-table depth for one (tm, tn) surface tile.

    p_ref   : VMEM (nz, tm, tn) pressure columns (native dtype)
    sat_ref : VMEM (nz, tm, tn) saturation columns (native dtype)
    out_ref : VMEM (tm, tn)     water-table depth (f32)
    elev    : tuple of nz Python floats, layer-center elevations
    thick   : Python float, domain thickness
    """
    tm, tn = out_ref.shape

    # Fused bottom-up select chain.  Initialize with the fully-saturated case
    # (the first unsaturated layer is the implicit all-zero layer the torch
    # module appends on top -> z = nz - 1); then for k = nz-1 .. 0, if
    # saturation[k] < 1 select the layer just below it (clamped at the bottom).
    # The last write (smallest unsaturated k) wins, matching argmax-first
    # semantics of the reference.
    ponding = p_ref[nz - 1].astype(jnp.float32)
    sat_elev = jnp.full((tm, tn), elev[nz - 1], dtype=jnp.float32)
    for k in range(nz - 1, -1, -1):
        kk = max(k - 1, 0)
        unsat = sat_ref[k].astype(jnp.float32) < 1.0
        ponding = jnp.where(unsat, p_ref[kk].astype(jnp.float32), ponding)
        sat_elev = jnp.where(unsat, jnp.float32(elev[kk]), sat_elev)

    wt_height = jnp.clip(sat_elev + ponding, 0.0, thick)
    out_ref[...] = (thick - wt_height).astype(out_ref.dtype)


def _vmem_capacity_bytes():
    try:
        info = pltpu.get_tpu_info()
        cap = getattr(info, "vmem_capacity_bytes", None)
        if cap:
            return int(cap)
    except Exception:
        pass
    return 64 << 20  # conservative default (v7x per-TensorCore VMEM)


def _legal_tiles(dim, unit):
    """Legal tile sizes for one of the last two block dims, descending:
    the full extent, plus any multiple of `unit` that divides `dim`."""
    cands = {dim}
    t = unit
    while t < dim:
        if dim % t == 0:
            cands.add(t)
        t += unit
    return sorted(cands, reverse=True)


def _choose_surface_tiles(ny, nx, per_elem_bytes, budget_bytes):
    """Largest lane-dense (tm, tn) surface tile whose double-buffered working
    set fits `budget_bytes`, preferring full rows (tn == nx) so the per-layer
    slab DMAs are contiguous."""
    def fits(tm, tn):
        return tm * tn * per_elem_bytes <= budget_bytes

    tm_cands = _legal_tiles(ny, 8)
    tn_cands = _legal_tiles(nx, 128)
    tm_min = tm_cands[-1]

    tn = next((t for t in tn_cands if fits(tm_min, t)), tn_cands[-1])
    tm = next((t for t in tm_cands if fits(t, tn)), tm_min)
    return tm, tn


def water_table_depth_forward(pressure, saturation, dz, depth_ax=1):
    """Pallas equivalent of WaterTableDepthHead.forward.

    pressure, saturation: arrays with the depth axis at `depth_ax`
    dz: 1-D layer thicknesses (bottom -> top); treated as static configuration.
    """
    pressure = jnp.asarray(pressure)
    saturation = jnp.asarray(saturation)

    # TODO(synk): dz is treated as static ParFlow configuration (baked-in
    # constants); a traced dz would need an SMEM scalar-prefetch operand path.
    dz_np = np.asarray(dz, dtype=np.float64).reshape(-1)
    elev = tuple(float(v) for v in (np.cumsum(dz_np) - 0.5 * dz_np))
    thick = float(np.sum(dz_np))

    dax = depth_ax % pressure.ndim
    # Depth to axis -3 so (ny, nx) map to (sublane, lane).  For the canonical
    # (batch, nz, ny, nx) / depth_ax=1 layout this is a no-op (no materialized
    # transpose); other layouts incur one XLA transpose pass.
    # TODO(synk): add a layout-specific variant (e.g. depth-last) if that
    # layout is hot -- a pre-kernel transpose roughly doubles HBM traffic.
    p = jnp.moveaxis(pressure, dax, -3)
    s = jnp.moveaxis(saturation, dax, -3)
    *lead, nz, ny, nx = p.shape
    if nz != dz_np.shape[0]:
        raise ValueError(f"dz has {dz_np.shape[0]} layers, depth axis has {nz}")
    b = int(np.prod(lead)) if lead else 1
    p = p.reshape(b, nz, ny, nx)
    s = s.reshape(b, nz, ny, nx)

    # Per-generation VMEM budget; working set counted exactly:
    # double-buffered pressure + saturation input tiles + f32 output tile.
    per_elem_bytes = 2 * nz * (p.dtype.itemsize + s.dtype.itemsize) + 2 * 4
    vmem_cap = _vmem_capacity_bytes()
    budget = max(4 << 20, min(int(vmem_cap * 0.35), 40 << 20))
    tm, tn = _choose_surface_tiles(ny, nx, per_elem_bytes, budget)

    # Guarantee >= 2 grid blocks when possible so both v7x TensorCores get
    # work (they share the chip's HBM bandwidth).
    if b * (ny // tm) * (nx // tn) < 2:
        if tm % 16 == 0 and ny % (tm // 2) == 0:
            tm //= 2
        elif tn % 256 == 0 and nx % (tn // 2) == 0:
            tn //= 2

    working_set = tm * tn * per_elem_bytes
    vmem_limit = int(min(vmem_cap - (4 << 20),
                         max(32 << 20, working_set + (4 << 20))))

    grid = (b, ny // tm, nx // tn)
    kernel = functools.partial(_wtd_kernel, elev=elev, thick=thick, nz=nz)
    col_spec = pl.BlockSpec((None, nz, tm, tn), lambda bb, i, j: (bb, 0, i, j))

    out = pl.pallas_call(
        kernel,
        out_shape=jax.ShapeDtypeStruct((b, ny, nx), jnp.float32),
        grid=grid,
        in_specs=[col_spec, col_spec],
        out_specs=pl.BlockSpec((None, tm, tn), lambda bb, i, j: (bb, i, j)),
        compiler_params=pltpu.CompilerParams(
            dimension_semantics=("parallel", "parallel", "parallel"),
            vmem_limit_bytes=vmem_limit),
    )(p, s)

    out_shape = tuple(d for i, d in enumerate(pressure.shape) if i != dax)
    return out.reshape(out_shape)


def _reference(pressure, saturation, dz, depth_ax=1):
    """Pure-JAX transcription of the torch module (for verification)."""
    pressure = jnp.asarray(pressure, jnp.float32)
    saturation = jnp.asarray(saturation, jnp.float32)
    dz = jnp.asarray(dz, jnp.float32).reshape(-1)
    thick = jnp.sum(dz)
    dz_e = jnp.concatenate([dz, jnp.zeros((1,), dz.dtype)])
    zeros_layer = jnp.zeros_like(
        jnp.take(saturation, jnp.array([0]), axis=depth_ax))
    sat_ext = jnp.concatenate([saturation, zeros_layer], axis=depth_ax)
    elev = jnp.cumsum(dz_e) - dz_e / 2.0
    shape = [1] * pressure.ndim
    shape[depth_ax] = elev.shape[0]
    elev = jnp.broadcast_to(elev.reshape(shape), sat_ext.shape)
    sat_layer = (sat_ext < 1).astype(jnp.float32)
    z_idx = jnp.maximum(jnp.argmax(sat_layer, axis=depth_ax) - 1, 0)
    z_idx_e = jnp.expand_dims(z_idx, depth_ax)
    sat_elev = jnp.take_along_axis(elev, z_idx_e, axis=depth_ax)
    ponding = jnp.take_along_axis(pressure, z_idx_e, axis=depth_ax)
    wt_height = jnp.clip(sat_elev + ponding, 0.0, thick)
    wtd = thick - wt_height
    return jnp.squeeze(wtd, axis=depth_ax)


if __name__ == "__main__":
    key = jax.random.PRNGKey(0)
    B, nz, ny, nx = 2, 5, 16, 128
    k1, k2 = jax.random.split(key)

    # Saturation in [0.8, 1.3): some columns fully saturated (z -> top layer),
    # some unsaturated from the bottom layer (z clamps to 0), most in between.
    saturation = 0.8 + 0.5 * jax.random.uniform(k1, (B, nz, ny, nx), jnp.float32)
    # Pressure head (positive and negative values exercise the clip path).
    pressure = 2.0 * jax.random.normal(k2, (B, nz, ny, nx), jnp.float32)
    # Layer thicknesses, bottom -> top.
    dz = jnp.array([2.0, 1.0, 0.6, 0.3, 0.1], jnp.float32)

    out = water_table_depth_forward(pressure, saturation, dz, depth_ax=1)
    out = jax.block_until_ready(out)

    ref = _reference(pressure, saturation, dz, depth_ax=1)
    assert out.shape == (B, ny, nx), out.shape
    np.testing.assert_allclose(np.asarray(out), np.asarray(ref),
                               rtol=1e-5, atol=1e-5)
    print("KERNEL_OK")
</pallas_src>

<mosaic_0001>
module attributes {stable_mosaic.version = 11 : i64} {
  func.func @_wtd_kernel(%arg0: i32, %arg1: i32, %arg2: i32, %arg3: memref<1x5x16x128xf32, #tpu.memory_space<vmem>>, %arg4: memref<1x5x16x128xf32, #tpu.memory_space<vmem>>, %arg5: memref<1x16x128xf32, #tpu.memory_space<vmem>>) attributes {dimension_semantics = [#tpu.dimension_semantics<parallel>, #tpu.dimension_semantics<parallel>, #tpu.dimension_semantics<parallel>], iteration_bounds = array<i64: 2, 1, 1>, scalar_prefetch = 0 : i64, scratch_operands = 0 : i64, tpu.core_type = #tpu.core_type<tc>, window_params = [{transform_indices = @transform_0, window_bounds = array<i64: 1, 5, 16, 128>}, {transform_indices = @transform_1, window_bounds = array<i64: 1, 5, 16, 128>}, {transform_indices = @transform_2, window_bounds = array<i64: 1, 16, 128>}]} {
    %c0 = arith.constant 0 : index
    %c4 = arith.constant 4 : index
    %c0_0 = arith.constant 0 : index
    %c0_1 = arith.constant 0 : index
    %0 = vector.load %arg3[%c0, %c4, %c0_0, %c0_1] : memref<1x5x16x128xf32, #tpu.memory_space<vmem>>, vector<1x1x16x128xf32>
    %1 = vector.shape_cast %0 : vector<1x1x16x128xf32> to vector<16x128xf32>
    %cst = arith.constant 3.950000e+00 : f32
    %2 = vector.broadcast %cst : f32 to vector<16x128xf32>
    %c0_2 = arith.constant 0 : index
    %c4_3 = arith.constant 4 : index
    %c0_4 = arith.constant 0 : index
    %c0_5 = arith.constant 0 : index
    %3 = vector.load %arg4[%c0_2, %c4_3, %c0_4, %c0_5] : memref<1x5x16x128xf32, #tpu.memory_space<vmem>>, vector<1x1x16x128xf32>
    %4 = vector.shape_cast %3 : vector<1x1x16x128xf32> to vector<16x128xf32>
    %cst_6 = arith.constant 1.000000e+00 : f32
    %5 = vector.broadcast %cst_6 : f32 to vector<16x128xf32>
    %6 = arith.cmpf olt, %4, %5 : vector<16x128xf32>
    %c0_7 = arith.constant 0 : index
    %c3 = arith.constant 3 : index
    %c0_8 = arith.constant 0 : index
    %c0_9 = arith.constant 0 : index
    %7 = vector.load %arg3[%c0_7, %c3, %c0_8, %c0_9] : memref<1x5x16x128xf32, #tpu.memory_space<vmem>>, vector<1x1x16x128xf32>
    %8 = vector.shape_cast %7 : vector<1x1x16x128xf32> to vector<16x128xf32>
    %9 = arith.select %6, %8, %1 : vector<16x128xi1>, vector<16x128xf32>
    %cst_10 = arith.constant 3.750000e+00 : f32
    %10 = vector.broadcast %cst_10 : f32 to vector<16x128xf32>
    %11 = arith.select %6, %10, %2 : vector<16x128xi1>, vector<16x128xf32>
    %c0_11 = arith.constant 0 : index
    %c3_12 = arith.constant 3 : index
    %c0_13 = arith.constant 0 : index
    %c0_14 = arith.constant 0 : index
    %12 = vector.load %arg4[%c0_11, %c3_12, %c0_13, %c0_14] : memref<1x5x16x128xf32, #tpu.memory_space<vmem>>, vector<1x1x16x128xf32>
    %13 = vector.shape_cast %12 : vector<1x1x16x128xf32> to vector<16x128xf32>
    %cst_15 = arith.constant 1.000000e+00 : f32
    %14 = vector.broadcast %cst_15 : f32 to vector<16x128xf32>
    %15 = arith.cmpf olt, %13, %14 : vector<16x128xf32>
    %c0_16 = arith.constant 0 : index
    %c2 = arith.constant 2 : index
    %c0_17 = arith.constant 0 : index
    %c0_18 = arith.constant 0 : index
    %16 = vector.load %arg3[%c0_16, %c2, %c0_17, %c0_18] : memref<1x5x16x128xf32, #tpu.memory_space<vmem>>, vector<1x1x16x128xf32>
    %17 = vector.shape_cast %16 : vector<1x1x16x128xf32> to vector<16x128xf32>
    %18 = arith.select %15, %17, %9 : vector<16x128xi1>, vector<16x128xf32>
    %cst_19 = arith.constant 3.300000e+00 : f32
    %19 = vector.broadcast %cst_19 : f32 to vector<16x128xf32>
    %20 = arith.select %15, %19, %11 : vector<16x128xi1>, vector<16x128xf32>
    %c0_20 = arith.constant 0 : index
    %c2_21 = arith.constant 2 : index
    %c0_22 = arith.constant 0 : index
    %c0_23 = arith.constant 0 : index
    %21 = vector.load %arg4[%c0_20, %c2_21, %c0_22, %c0_23] : memref<1x5x16x128xf32, #tpu.memory_space<vmem>>, vector<1x1x16x128xf32>
    %22 = vector.shape_cast %21 : vector<1x1x16x128xf32> to vector<16x128xf32>
    %cst_24 = arith.constant 1.000000e+00 : f32
    %23 = vector.broadcast %cst_24 : f32 to vector<16x128xf32>
    %24 = arith.cmpf olt, %22, %23 : vector<16x128xf32>
    %c0_25 = arith.constant 0 : index
    %c1 = arith.constant 1 : index
    %c0_26 = arith.constant 0 : index
    %c0_27 = arith.constant 0 : index
    %25 = vector.load %arg3[%c0_25, %c1, %c0_26, %c0_27] : memref<1x5x16x128xf32, #tpu.memory_space<vmem>>, vector<1x1x16x128xf32>
    %26 = vector.shape_cast %25 : vector<1x1x16x128xf32> to vector<16x128xf32>
    %27 = arith.select %24, %26, %18 : vector<16x128xi1>, vector<16x128xf32>
    %cst_28 = arith.constant 2.500000e+00 : f32
    %28 = vector.broadcast %cst_28 : f32 to vector<16x128xf32>
    %29 = arith.select %24, %28, %20 : vector<16x128xi1>, vector<16x128xf32>
    %c0_29 = arith.constant 0 : index
    %c1_30 = arith.constant 1 : index
    %c0_31 = arith.constant 0 : index
    %c0_32 = arith.constant 0 : index
    %30 = vector.load %arg4[%c0_29, %c1_30, %c0_31, %c0_32] : memref<1x5x16x128xf32, #tpu.memory_space<vmem>>, vector<1x1x16x128xf32>
    %31 = vector.shape_cast %30 : vector<1x1x16x128xf32> to vector<16x128xf32>
    %cst_33 = arith.constant 1.000000e+00 : f32
    %32 = vector.broadcast %cst_33 : f32 to vector<16x128xf32>
    %33 = arith.cmpf olt, %31, %32 : vector<16x128xf32>
    %c0_34 = arith.constant 0 : index
    %c0_35 = arith.constant 0 : index
    %c0_36 = arith.constant 0 : index
    %c0_37 = arith.constant 0 : index
    %34 = vector.load %arg3[%c0_34, %c0_35, %c0_36, %c0_37] : memref<1x5x16x128xf32, #tpu.memory_space<vmem>>, vector<1x1x16x128xf32>
    %35 = vector.shape_cast %34 : vector<1x1x16x128xf32> to vector<16x128xf32>
    %36 = arith.select %33, %35, %27 : vector<16x128xi1>, vector<16x128xf32>
    %cst_38 = arith.constant 1.000000e+00 : f32
    %37 = vector.broadcast %cst_38 : f32 to vector<16x128xf32>
    %38 = arith.select %33, %37, %29 : vector<16x128xi1>, vector<16x128xf32>
    %c0_39 = arith.constant 0 : index
    %c0_40 = arith.constant 0 : index
    %c0_41 = arith.constant 0 : index
    %c0_42 = arith.constant 0 : index
    %39 = vector.load %arg4[%c0_39, %c0_40, %c0_41, %c0_42] : memref<1x5x16x128xf32, #tpu.memory_space<vmem>>, vector<1x1x16x128xf32>
    %40 = vector.shape_cast %39 : vector<1x1x16x128xf32> to vector<16x128xf32>
    %cst_43 = arith.constant 1.000000e+00 : f32
    %41 = vector.broadcast %cst_43 : f32 to vector<16x128xf32>
    %42 = arith.cmpf olt, %40, %41 : vector<16x128xf32>
    %c0_44 = arith.constant 0 : index
    %c0_45 = arith.constant 0 : index
    %c0_46 = arith.constant 0 : index
    %c0_47 = arith.constant 0 : index
    %43 = vector.load %arg3[%c0_44, %c0_45, %c0_46, %c0_47] : memref<1x5x16x128xf32, #tpu.memory_space<vmem>>, vector<1x1x16x128xf32>
    %44 = vector.shape_cast %43 : vector<1x1x16x128xf32> to vector<16x128xf32>
    %45 = arith.select %42, %44, %36 : vector<16x128xi1>, vector<16x128xf32>
    %cst_48 = arith.constant 1.000000e+00 : f32
    %46 = vector.broadcast %cst_48 : f32 to vector<16x128xf32>
    %47 = arith.select %42, %46, %38 : vector<16x128xi1>, vector<16x128xf32>
    %48 = arith.addf %47, %45 : vector<16x128xf32>
    %cst_49 = arith.constant 0.000000e+00 : f32
    %cst_50 = arith.constant 4.000000e+00 : f32
    %49 = vector.broadcast %cst_49 : f32 to vector<16x128xf32>
    %50 = arith.maximumf %49, %48 : vector<16x128xf32>
    %51 = vector.broadcast %cst_50 : f32 to vector<16x128xf32>
    %52 = arith.minimumf %51, %50 : vector<16x128xf32>
    %cst_51 = arith.constant 4.000000e+00 : f32
    %53 = vector.broadcast %cst_51 : f32 to vector<16x128xf32>
    %54 = arith.subf %53, %52 : vector<16x128xf32>
    %c0_52 = arith.constant 0 : index
    %c0_53 = arith.constant 0 : index
    %c0_54 = arith.constant 0 : index
    %55 = vector.load %arg5[%c0_52, %c0_53, %c0_54] : memref<1x16x128xf32, #tpu.memory_space<vmem>>, vector<1x16x128xf32>
    %56 = vector.shape_cast %55 : vector<1x16x128xf32> to vector<16x128xf32>
    %57 = vector.shape_cast %54 : vector<16x128xf32> to vector<1x16x128xf32>
    tpu.vector_store %arg5[%c0_52, %c0_53, %c0_54], %57 {strides = array<i32>} : memref<1x16x128xf32, #tpu.memory_space<vmem>>, vector<1x16x128xf32>,
    return
  }
  func.func @transform_0(%arg0: i32, %arg1: i32, %arg2: i32) -> (i32, i32, i32, i32) {
    %c0_i32 = arith.constant 0 : i32
    %c0_i32_0 = arith.constant 0 : i32
    return %arg0, %c0_i32, %arg1, %arg2 : i32, i32, i32, i32
  }
  func.func @transform_1(%arg0: i32, %arg1: i32, %arg2: i32) -> (i32, i32, i32, i32) {
    %c0_i32 = arith.constant 0 : i32
    %c0_i32_0 = arith.constant 0 : i32
    return %arg0, %c0_i32, %arg1, %arg2 : i32, i32, i32, i32
  }
  func.func @transform_2(%arg0: i32, %arg1: i32, %arg2: i32) -> (i32, i32, i32) {
    %c0_i32 = arith.constant 0 : i32
    return %arg0, %arg1, %arg2 : i32, i32, i32
  }
}

</mosaic_0001>

<llo_original>
// kernel: tpu_custom_call.1
$region0: #{tpu_custom_call.1}
  #allocation0 [shape = 'u32[]', space=smem, size = 0x4, offset = 0x4, fixed_abs, tag = 'smem constant byte address 0x4 - core index']
  #allocation1 [shape = 'u32[144,128]{1,0:T(1,128)}', space=vmem, size = 0x12000, scoped, tag = 'internal scratch']
  %s0 = inlined_call_operand.hbm [shape: f32[2,5,16,128], index: 0, kind: input, shape index: {}]
  %s1 = inlined_call_operand.hbm [shape: f32[2,5,16,128], index: 1, kind: input, shape index: {}]
  %s2 = inlined_call_operand.hbm [shape: f32[2,16,128], index: 2, kind: output, shape index: {}]
  %s3 = sld [smem:[#allocation0]]
  $region49: #{tpu_custom_call.1} parent=0
    _
  %s5 = ssub.s32 1, %s3
  %s6 = scalar_select 0, %s5, %s3
  $region1: #{tpu_custom_call.1} parent=0
    #allocation2 [shape = 'u8[81920]{0}', space=vmem, size = 0x14000, scoped, tag = 'input window, operand 0']
    #allocation3 [shape = 's32[2]{0}', space=sflag, size = 0x8, scoped, tag = 'scoped memory for tpu_custom_call.1']
    #allocation4 [shape = 's32[2]{0}', space=sflag, size = 0x8, scoped, tag = 'scoped memory for tpu_custom_call.1']
    #allocation5 [shape = 'u8[81920]{0}', space=vmem, size = 0x14000, scoped, tag = 'input window, operand 1']
    #allocation6 [shape = 's32[2]{0}', space=sflag, size = 0x8, scoped, tag = 'scoped memory for tpu_custom_call.1']
    #allocation7 [shape = 'u8[16384]{0}', space=vmem, size = 0x4000, scoped, tag = 'output window, operand 0']
    %7 = vsyncpa [#allocation3], 0
    %s8 = scalar_lea.sflag [#allocation3], 1
    %9 = vsyncpa %s8, 0
    %10 = vsyncpa [#allocation6], 0
    %s11 = scalar_lea.sflag [#allocation6], 1
    %12 = vsyncpa %s11, 0
    %13 = vsyncpa [#allocation4], 0
    %s14 = scalar_lea.sflag [#allocation4], 1
    %15 = vsyncpa %s14, 0
    loop: start=0, step=1, limit=4
    $region2: #{tpu_custom_call.1} parent=1 // loop_pre_header
      _
    $region3: #{tpu_custom_call.1} parent=1 // loop_header
      %s17 = sphi 0, %s21
      %p18 = scmp.ge.s32.totalorder %s17, 4
      %s24 = sphi 0, %s43
      %s25 = sphi 0, %s39
      %s26 = sphi 0, %s35
      %s27 = sphi 0, %s24
      %s28 = sphi 0, %s25
      %s29 = sphi 0, %s26
      %s30 = sphi 0, %s27
      %s31 = sphi 0, %s28
      %s32 = sphi 0, %s29
      %s50 = sphi 0, %s52
      %s53 = sphi 0, %s50
      %s54 = sphi 0, %s53
      %s70 = sphi 0, %s54
      %s80 = sphi 0, %s82
      %s83 = sphi 0, %s80
      %s84 = sphi 0, %s83
      %s100 = sphi 0, %s84
      %s110 = sphi 0, %s112
      %s113 = sphi 0, %s110
      %s114 = sphi 0, %s113
      %s130 = sphi 0, %s114
    $region4: #{tpu_custom_call.1} parent=1 // loop_header_branch
      %20 = sbr.rel (%p18) target = $region8
    $region5: #{tpu_custom_call.1} parent=1 // loop_body
      %s22 = ssub.s32 %s17, 1
      %s23 = ssub.s32 %s17, 2
      %s33 = sadd.s32 1, %s26
      %p34 = scmp.ge.s32.totalorder %s33, 1
      %s35 = scalar_select %p34, 0, %s33
      %s36 = sadd.s32 1, %s25
      %s37 = scalar_select %p34, %s36, %s25
      %p38 = scmp.ge.s32.totalorder %s37, 1
      %s39 = scalar_select %p38, 0, %s37
      %s40 = sadd.s32 1, %s24
      %s41 = scalar_select %p38, %s40, %s24
      %p42 = scmp.ge.s32.totalorder %s41, 2
      %s43 = scalar_select %p42, 0, %s41
      %s44 = ssub.s32 %s24, %s43
      %s45 = ssub.s32 %s25, %s39
      %s46 = sor.u32 %s44, %s45
      %s47 = ssub.s32 %s26, %s35
      %s48 = sor.u32 %s46, %s47
      %p49 = scmp.eq.s32.totalorder %s48, 0
      %s51 = sadd.s32 %s50, 1
      %s52 = scalar_select %p49, %s50, %s51
      %p55 = pneg %p49
      %p56 = scmp.eq.s32.totalorder %s17, 1
      %p57 = por %p55, %p56
      %p58 = scmp.ne.s32.totalorder %s50, %s53
      %p59 = scmp.eq.s32.totalorder %s17, 0
      %p60 = por %p58, %p59
      %p61 = scmp.ne.s32.totalorder %s50, %s53
      %p62 = scmp.eq.s32.totalorder %s22, 1
      %p63 = por %p61, %p62
      %p64 = scmp.ne.s32.totalorder %s53, %s54
      %p65 = scmp.eq.s32.totalorder %s22, 0
      %p66 = por %p64, %p65
      %p67 = scmp.ne.s32.totalorder %s53, %s54
      %p68 = scmp.eq.s32.totalorder %s23, 1
      %p69 = por %p67, %p68
      %p71 = scmp.ne.s32.totalorder %s54, %s70
      %p72 = scmp.eq.s32.totalorder %s23, 0
      %p73 = por %p71, %p72
      %s74 = ssub.s32 %s24, %s43
      %s75 = ssub.s32 %s25, %s39
      %s76 = sor.u32 %s74, %s75
      %s77 = ssub.s32 %s26, %s35
      %s78 = sor.u32 %s76, %s77
      %p79 = scmp.eq.s32.totalorder %s78, 0
      %s81 = sadd.s32 %s80, 1
      %s82 = scalar_select %p79, %s80, %s81
      %p85 = pneg %p79
      %p86 = scmp.eq.s32.totalorder %s17, 1
      %p87 = por %p85, %p86
      %p88 = scmp.ne.s32.totalorder %s80, %s83
      %p89 = scmp.eq.s32.totalorder %s17, 0
      %p90 = por %p88, %p89
      %p91 = scmp.ne.s32.totalorder %s80, %s83
      %p92 = scmp.eq.s32.totalorder %s22, 1
      %p93 = por %p91, %p92
      %p94 = scmp.ne.s32.totalorder %s83, %s84
      %p95 = scmp.eq.s32.totalorder %s22, 0
      %p96 = por %p94, %p95
      %p97 = scmp.ne.s32.totalorder %s83, %s84
      %p98 = scmp.eq.s32.totalorder %s23, 1
      %p99 = por %p97, %p98
      %p101 = scmp.ne.s32.totalorder %s84, %s100
      %p102 = scmp.eq.s32.totalorder %s23, 0
      %p103 = por %p101, %p102
      %s104 = ssub.s32 %s24, %s43
      %s105 = ssub.s32 %s25, %s39
      %s106 = sor.u32 %s104, %s105
      %s107 = ssub.s32 %s26, %s35
      %s108 = sor.u32 %s106, %s107
      %p109 = scmp.eq.s32.totalorder %s108, 0
      %s111 = sadd.s32 %s110, 1
      %s112 = scalar_select %p109, %s110, %s111
      %p115 = pneg %p109
      %p116 = scmp.eq.s32.totalorder %s17, 1
      %p117 = por %p115, %p116
      %p118 = scmp.ne.s32.totalorder %s110, %s113
      %p119 = scmp.eq.s32.totalorder %s17, 0
      %p120 = por %p118, %p119
      %p121 = scmp.ne.s32.totalorder %s110, %s113
      %p122 = scmp.eq.s32.totalorder %s22, 1
      %p123 = por %p121, %p122
      %p124 = scmp.ne.s32.totalorder %s113, %s114
      %p125 = scmp.eq.s32.totalorder %s22, 0
      %p126 = por %p124, %p125
      %p127 = scmp.ne.s32.totalorder %s113, %s114
      %p128 = scmp.eq.s32.totalorder %s23, 1
      %p129 = por %p127, %p128
      %p131 = scmp.ne.s32.totalorder %s114, %s130
      %p132 = scmp.eq.s32.totalorder %s23, 0
      %p133 = por %p131, %p132
      %p134 = scmp.le.s32.totalorder 1, %s17
      %p135 = scmp.lt.s32.totalorder %s17, 3
      %p136 = pnand %p134, %p135
      %p137 = pneg %p136
      // Predicated region
      $region9: #{tpu_custom_call.1} parent=5 // pred_check
        _
      $region10: #{tpu_custom_call.1} parent=5 // pred_check_branch
        %139 = sbr.rel (%p136) target = $region12
      $region11: #{tpu_custom_call.1} parent=5 // pred_region
        %s140 = ssub.s32 %s17, 1
      $region12: #{tpu_custom_call.1} parent=5 // pred_fallthru
        _
      %p141 = scmp.lt.s32.totalorder %s17, 2
      // Predicated region
      $region13: #{tpu_custom_call.1} parent=5 // pred_check
        %p142 = pneg %p141
      $region14: #{tpu_custom_call.1} parent=5 // pred_check_branch
        %144 = sbr.rel (%p142) target = $region16
      $region15: #{tpu_custom_call.1} parent=5 // pred_region
        // Predicated region
        $region17: #{tpu_custom_call.1} parent=15 // pred_check
          %p145 = pneg %p60
        $region18: #{tpu_custom_call.1} parent=15 // pred_check_branch
          %147 = sbr.rel (%p145) target = $region20
        $region19: #{tpu_custom_call.1} parent=15 // pred_region
          %s148 = sand.u32 %s50, 1
          %s149 = scalar_lea.sflag [#allocation3], %s148
          %s150 = sand.u32 %s50, 1
          %s151 = smul.addr %s150, 80
          %s152 = scalar_lea.vmem [#allocation2], %s151
          %s153 = smul.u32 2, %s25
          %s155 = ssub.s32 1280, 1280
          %156 = vsyncadd %s149, %s155
          %s157 = sadd.s32 %s26, %s153
          %s158 = smul.addr %s24, 10
          %s159 = sadd.s32 %s157, %s158
          %s160 = smul.addr %s159, 128
          %s161 = scalar_lea.hbm %s0, %s160
          %s162 = sshll.u32 %s152, 4
          %s163 = int_to_ptr.vmem [resolvable:$true] %s162
          %168 = dma.hbm_to_vmem [thread:$0]  %s161, 1280, %s163, %s149, 128, 128, 8
        $region20: #{tpu_custom_call.1} parent=15 // pred_fallthru
          _
        // Predicated region
        $region21: #{tpu_custom_call.1} parent=15 // pred_check
          %p169 = pneg %p90
        $region22: #{tpu_custom_call.1} parent=15 // pred_check_branch
          %171 = sbr.rel (%p169) target = $region24
        $region23: #{tpu_custom_call.1} parent=15 // pred_region
          %s172 = sand.u32 %s80, 1
          %s173 = scalar_lea.sflag [#allocation6], %s172
          %s174 = sand.u32 %s80, 1
          %s175 = smul.addr %s174, 80
          %s176 = scalar_lea.vmem [#allocation5], %s175
          %s177 = smul.u32 2, %s25
          %s179 = ssub.s32 1280, 1280
          %180 = vsyncadd %s173, %s179
          %s181 = sadd.s32 %s26, %s177
          %s182 = smul.addr %s24, 10
          %s183 = sadd.s32 %s181, %s182
          %s184 = smul.addr %s183, 128
          %s185 = scalar_lea.hbm %s1, %s184
          %s186 = sshll.u32 %s176, 4
          %s187 = int_to_ptr.vmem [resolvable:$true] %s186
          %192 = dma.hbm_to_vmem [thread:$0]  %s185, 1280, %s187, %s173, 128, 128, 8
        $region24: #{tpu_custom_call.1} parent=15 // pred_fallthru
          _
      $region16: #{tpu_custom_call.1} parent=5 // pred_fallthru
        _
      %p193 = scmp.le.s32.totalorder 1, %s17
      %p194 = scmp.lt.s32.totalorder %s17, 3
      %p195 = pnand %p193, %p194
      %p196 = pneg %p195
      // Predicated region
      $region25: #{tpu_custom_call.1} parent=5 // pred_check
        _
      $region26: #{tpu_custom_call.1} parent=5 // pred_check_branch
        %198 = sbr.rel (%p195) target = $region28
      $region27: #{tpu_custom_call.1} parent=5 // pred_region
        %s199 = ssub.s32 %s17, 1
        %s200 = sand.u32 %s53, 1
        %s201 = scalar_lea.sflag [#allocation3], %s200
        %s202 = sand.u32 %s53, 1
        %s203 = smul.addr %s202, 80
        %s204 = scalar_lea.vmem [#allocation2], %s203
        // Predicated region
        $region29: #{tpu_custom_call.1} parent=27 // pred_check
          %p205 = pneg %p66
        $region30: #{tpu_custom_call.1} parent=27 // pred_check_branch
          %207 = sbr.rel (%p205) target = $region32
        $region31: #{tpu_custom_call.1} parent=27 // pred_region
          %208 = dma.done %s201, 1280
        $region32: #{tpu_custom_call.1} parent=27 // pred_fallthru
          _
        %s209 = sand.u32 %s83, 1
        %s210 = scalar_lea.sflag [#allocation6], %s209
        %s211 = sand.u32 %s83, 1
        %s212 = smul.addr %s211, 80
        %s213 = scalar_lea.vmem [#allocation5], %s212
        // Predicated region
        $region33: #{tpu_custom_call.1} parent=27 // pred_check
          %p214 = pneg %p96
        $region34: #{tpu_custom_call.1} parent=27 // pred_check_branch
          %216 = sbr.rel (%p214) target = $region36
        $region35: #{tpu_custom_call.1} parent=27 // pred_region
          %217 = dma.done %s210, 1280
        $region36: #{tpu_custom_call.1} parent=27 // pred_fallthru
          _
        %s218 = sand.u32 %s53, 1
        %s219 = scalar_lea.sflag [#allocation3], %s218
        %s220 = sand.u32 %s53, 1
        %s221 = smul.addr %s220, 80
        %s222 = scalar_lea.vmem [#allocation2], %s221
        %p223 = pneg %p66
        %p224 = pneg %p63
        %s225 = sand.u32 %s83, 1
        %s226 = scalar_lea.sflag [#allocation6], %s225
        %s227 = sand.u32 %s83, 1
        %s228 = smul.addr %s227, 80
        %s229 = scalar_lea.vmem [#allocation5], %s228
        %p230 = pneg %p96
        %p231 = pneg %p93
        %p232 = pneg %p126
        %p233 = pneg %p123
        %s234 = sand.u32 %s113, 1
        %s235 = scalar_lea.sflag [#allocation4], %s234
        %s236 = sand.u32 %s113, 1
        %s237 = smul.addr %s236, 16
        %s238 = scalar_lea.vmem [#allocation7], %s237
        %s239 = smul.u32 2, %s28
        %s240 = smul.u32 2, %s28
        %s241 = smul.u32 2, %s28
        %s242 = scalar_lea.vmem %s204, 64 [#allocation2]
        %v243 = vld [vmem:[%s242] sm:$0xff]
        %v244 = vld [vmem:[%s242 + $0x8] sm:$0xff]
        %s245 = scalar_lea.vmem %s213, 64 [#allocation5]
        %v246 = vld [vmem:[%s245] sm:$0xff]
        %v247 = vld [vmem:[%s245 + $0x8] sm:$0xff]
        %vm248 = vcmp.lt.f32.partialorder %v246, 1.0
        %vm249 = vcmp.lt.f32.partialorder %v247, 1.0
        %s250 = scalar_lea.vmem %s204, 48 [#allocation2]
        %v251 = vld [vmem:[%s250] sm:$0xff]
        %v252 = vld [vmem:[%s250 + $0x8] sm:$0xff]
        %v253 = vsel %vm248, %v251, %v243
        %v254 = vsel %vm249, %v252, %v244
        %v255 = vsel %vm248, 3.75, 3.95
        %v256 = vsel %vm249, 3.75, 3.95
        %s257 = scalar_lea.vmem %s213, 48 [#allocation5]
        %v258 = vld [vmem:[%s257] sm:$0xff]
        %v259 = vld [vmem:[%s257 + $0x8] sm:$0xff]
        %vm260 = vcmp.lt.f32.partialorder %v258, 1.0
        %vm261 = vcmp.lt.f32.partialorder %v259, 1.0
        %s262 = scalar_lea.vmem %s204, 32 [#allocation2]
        %v263 = vld [vmem:[%s262] sm:$0xff]
        %v264 = vld [vmem:[%s262 + $0x8] sm:$0xff]
        %v265 = vsel %vm260, %v263, %v253
        %v266 = vsel %vm261, %v264, %v254
        %v267 = vsel %vm260, 3.3, %v255
        %v268 = vsel %vm261, 3.3, %v256
        %s269 = scalar_lea.vmem %s213, 32 [#allocation5]
        %v270 = vld [vmem:[%s269] sm:$0xff]
        %v271 = vld [vmem:[%s269 + $0x8] sm:$0xff]
        %vm272 = vcmp.lt.f32.partialorder %v270, 1.0
        %vm273 = vcmp.lt.f32.partialorder %v271, 1.0
        %s274 = scalar_lea.vmem %s204, 16 [#allocation2]
        %v275 = vld [vmem:[%s274] sm:$0xff]
        %v276 = vld [vmem:[%s274 + $0x8] sm:$0xff]
        %v277 = vsel %vm272, %v275, %v265
        %v278 = vsel %vm273, %v276, %v266
        %v279 = vsel %vm272, 2.5, %v267
        %v280 = vsel %vm273, 2.5, %v268
        %s281 = scalar_lea.vmem %s213, 16 [#allocation5]
        %v282 = vld [vmem:[%s281] sm:$0xff]
        %v283 = vld [vmem:[%s281 + $0x8] sm:$0xff]
        %vm284 = vcmp.lt.f32.partialorder %v282, 1.0
        %vm285 = vcmp.lt.f32.partialorder %v283, 1.0
        %v286 = vld [vmem:[%s204] sm:$0xff]
        %v287 = vld [vmem:[%s204 + $0x8] sm:$0xff]
        %v288 = vsel %vm284, %v286, %v277
        %v289 = vsel %vm285, %v287, %v278
        %v290 = vsel %vm284, 1.0, %v279
        %v291 = vsel %vm285, 1.0, %v280
        %v292 = vld [vmem:[%s213] sm:$0xff]
        %v293 = vld [vmem:[%s213 + $0x8] sm:$0xff]
        %vm294 = vcmp.lt.f32.partialorder %v292, 1.0
        %vm295 = vcmp.lt.f32.partialorder %v293, 1.0
        %v296 = vsel %vm294, %v286, %v288
        %v297 = vsel %vm295, %v287, %v289
        %v298 = vsel %vm294, 1.0, %v290
        %v299 = vsel %vm295, 1.0, %v291
        %v300 = vadd.f32 %v298, %v296
        %v301 = vadd.f32 %v299, %v297
        %v302 = vmax.f32 %v300, 0.0
        %v303 = vmax.f32 %v301, 0.0
        %v304 = vmin.f32 %v302, 4.0
        %v305 = vmin.f32 %v303, 4.0
        %v306 = vsub.f32 4.0, %v304
        %v307 = vsub.f32 4.0, %v305
        %308 = vst [vmem:[%s238] sm:$0xff] %v306
        %309 = vst [vmem:[%s238 + $0x8] sm:$0xff] %v307
        %s310 = sand.u32 %s113, 1
        %s311 = scalar_lea.sflag [#allocation4], %s310
        %s312 = sand.u32 %s113, 1
        %s313 = smul.addr %s312, 16
        %s314 = scalar_lea.vmem [#allocation7], %s313
        // Predicated region
        $region37: #{tpu_custom_call.1} parent=27 // pred_check
          %p315 = pneg %p123
        $region38: #{tpu_custom_call.1} parent=27 // pred_check_branch
          %317 = sbr.rel (%p315) target = $region40
        $region39: #{tpu_custom_call.1} parent=27 // pred_region
          %s318 = smul.u32 2, %s28
          %s320 = ssub.s32 256, 256
          %321 = vsyncadd %s311, %s320
          %s322 = sadd.s32 %s29, %s318
          %s323 = smul.addr %s27, 2
          %s324 = sadd.s32 %s322, %s323
          %s325 = smul.addr %s324, 128
          %s326 = scalar_lea.hbm %s2, %s325
          %s327 = sshll.u32 %s314, 4
          %s328 = int_to_ptr.vmem [resolvable:$true] %s327
          %333 = dma.vmem_to_hbm [thread:$0]  %s328, 256, %s326, %s311, 128, 128, 8
        $region40: #{tpu_custom_call.1} parent=27 // pred_fallthru
          _
      $region28: #{tpu_custom_call.1} parent=5 // pred_fallthru
        _
      %p334 = scmp.le.s32.totalorder 2, %s17
      // Predicated region
      $region41: #{tpu_custom_call.1} parent=5 // pred_check
        %p335 = pneg %p334
      $region42: #{tpu_custom_call.1} parent=5 // pred_check_branch
        %337 = sbr.rel (%p335) target = $region44
      $region43: #{tpu_custom_call.1} parent=5 // pred_region
        %s338 = ssub.s32 %s17, 2
        // Predicated region
        $region45: #{tpu_custom_call.1} parent=43 // pred_check
          %p339 = pneg %p129
        $region46: #{tpu_custom_call.1} parent=43 // pred_check_branch
          %341 = sbr.rel (%p339) target = $region48
        $region47: #{tpu_custom_call.1} parent=43 // pred_region
          %s342 = sand.u32 %s114, 1
          %s343 = scalar_lea.sflag [#allocation4], %s342
          %s344 = sand.u32 %s114, 1
          %s345 = smul.addr %s344, 16
          %s346 = scalar_lea.vmem [#allocation7], %s345
          %347 = dma.done %s343, 256
        $region48: #{tpu_custom_call.1} parent=43 // pred_fallthru
          _
      $region44: #{tpu_custom_call.1} parent=5 // pred_fallthru
        _
    $region6: #{tpu_custom_call.1} parent=1 // loop_footer
      %s21 = sadd.s32 1, %s17
    $region7: #{tpu_custom_call.1} parent=1 // loop_footer_branch
      %16 = sbr.rel target = $region3
    $region8: #{tpu_custom_call.1} parent=1 // loop_exit
      _
    %348 = vsyncpa [#allocation3], 1
    %s349 = scalar_lea.sflag [#allocation3], 1
    %350 = vsyncpa %s349, 1
    %351 = vsyncpa [#allocation6], 1
    %s352 = scalar_lea.sflag [#allocation6], 1
    %353 = vsyncpa %s352, 1
    %354 = vsyncpa [#allocation4], 1
    %s355 = scalar_lea.sflag [#allocation4], 1
    %356 = vsyncpa %s355, 1

</llo_original>
